<compile_context>
chip_gen: v7x
topology: tpu7x:2x2x1
jax: 0.10.0
libtpu: 0.0.40
codegen_flags: <defaults>
</compile_context>

<pallas_src>
import functools

import jax
import jax.numpy as jnp
from jax import lax
from jax.experimental import pallas as pl
from jax.experimental.pallas import tpu as pltpu

_LANES = 128
_ACC_SUBLANES = 8            # f32 accumulator sublane tile
_MAX_ROW_TILE = 2048         # 2048 * 128 * 4B = 1 MiB per pipeline buffer
_SMALL_THRESHOLD = 1 << 18   # combined element count for the fused fast path


def _round_up(x, m):
    return ((x + m - 1) // m) * m


def _num_tensorcores():
    """TensorCores per chip: 2 on v7x, 1 on v5e/v6e (and on any failure)."""
    try:
        dev = jax.devices()[0]
        if getattr(dev, "platform", "") != "tpu":
            return 1
        kind = str(getattr(dev, "device_kind", "")).lower()
        if "v7" in kind or "7x" in kind:
            # TODO(synk): verify in an xprof trace that CORE_PARALLEL actually
            # lands the two splits on both v7x TensorCores.
            return 2
    except Exception:
        pass
    return 1


def _as_2d(x):
    """Free (bitcast) 2-D view of a prediction: no pad, no HBM copy.

    Prefer a lane-dense (n//128, 128) view when the element count allows;
    otherwise collapse leading dims so the original last dim stays on lanes.
    """
    n = x.size
    if n % _LANES == 0 and n > 0:
        return x.reshape(n // _LANES, _LANES)
    if x.ndim >= 2:
        return x.reshape(-1, x.shape[-1])
    return x.reshape(1, max(n, 1))


# ---------------------------------------------------------------------------
# Small-input fast path: one kernel, whole arrays, full loss fused in-kernel.
# ---------------------------------------------------------------------------
def _make_fused_loss_kernel(inv_n_real, inv_n_fake):
    def kernel(real_ref, fake_ref, out_ref):
        r = real_ref[...].astype(jnp.float32)
        f = fake_ref[...].astype(jnp.float32)
        dr = r - 1.0
        s_real = jnp.sum(dr * dr, keepdims=True)   # (1, 1)
        s_fake = jnp.sum(f * f, keepdims=True)     # (1, 1)
        out_ref[...] = s_real * inv_n_real + s_fake * inv_n_fake
    return kernel


def _fused_small_loss(real2d, fake2d, n_real, n_fake):
    kernel = _make_fused_loss_kernel(1.0 / n_real, 1.0 / n_fake)
    nbytes = (real2d.size * real2d.dtype.itemsize
              + fake2d.size * fake2d.dtype.itemsize)
    out = pl.pallas_call(
        kernel,
        out_shape=jax.ShapeDtypeStruct((1, 1), jnp.float32),
        cost_estimate=pl.CostEstimate(
            flops=3 * (n_real + n_fake),
            transcendentals=0,
            bytes_accessed=int(nbytes) + 4),
    )(real2d, fake2d)
    return out[0, 0]


# ---------------------------------------------------------------------------
# Large-input path: streaming, pipelined mean((x - target)^2) per prediction.
# ---------------------------------------------------------------------------
def _make_stream_kernel(target, rows, cols, row_tile, num_tiles, need_mask,
                        inv_n):
    def kernel(x_ref, out_ref, acc_ref):
        ti = pl.program_id(1)

        @pl.when(ti == 0)
        def _init():
            acc_ref[...] = jnp.zeros_like(acc_ref)

        x = x_ref[...].astype(jnp.float32)         # per-tile cast (v5e-safe)
        d = x - target
        sq = d * d

        def accumulate(vals):
            # (row_tile, cols) -> (row_tile//8, 8, cols); axis-0 sum is pure
            # vreg-wise VPU adds -> no XLU work in the hot loop.
            acc_ref[...] += jnp.sum(
                vals.reshape(-1, _ACC_SUBLANES, cols), axis=0)

        if need_mask:
            # Only the boundary (ragged / over-run) blocks need masking; the
            # steady-state tiles take the unmasked branch.
            base = (pl.program_id(0) * num_tiles + ti) * row_tile
            is_boundary = base + row_tile > rows

            @pl.when(is_boundary)
            def _masked():
                row_ids = base + lax.broadcasted_iota(
                    jnp.int32, (row_tile, cols), 0)
                accumulate(jnp.where(row_ids < rows, sq, 0.0))

            @pl.when(jnp.logical_not(is_boundary))
            def _unmasked():
                accumulate(sq)
        else:
            accumulate(sq)

        @pl.when(ti == pl.num_programs(1) - 1)
        def _finalize():
            # Final cross-lane/sublane reduce + normalization once per split.
            out_ref[...] = jnp.sum(acc_ref[...], keepdims=True) * inv_n

    return kernel


def _mse_const_streaming(pred, target, num_splits, max_row_tile=_MAX_ROW_TILE):
    """mean((pred - target)^2) as a pipelined streaming Pallas reduction."""
    n = int(pred.size)
    view = _as_2d(pred)                      # free reshape, no padded copy
    rows, cols = view.shape

    # dtype-native sublane packing: 8 f32, 16 bf16/f16, 32 int8/fp8.
    packing = max(1, 4 // max(1, view.dtype.itemsize))
    sub = _ACC_SUBLANES * packing
    row_tile = min(max_row_tile, _round_up(pl.cdiv(rows, num_splits), sub))
    row_tile = max(sub, _round_up(row_tile, sub))

    num_tiles = pl.cdiv(rows, num_splits * row_tile)
    blocks_total = pl.cdiv(rows, row_tile)
    need_mask = (num_splits * num_tiles * row_tile) != rows

    # TODO(synk): a pathological 1-D, non-128-divisible, multi-MB prediction
    # would need an extra re-chunking pass (cols here could exceed VMEM); not
    # a realistic discriminator output shape.

    kernel = _make_stream_kernel(float(target), rows, cols, row_tile,
                                 num_tiles, need_mask, 1.0 / n)

    if num_splits > 1:
        dims = (pltpu.CORE_PARALLEL, pltpu.ARBITRARY)   # both TCs on v7x
    else:
        dims = (pltpu.PARALLEL, pltpu.ARBITRARY)

    def row_block(pi, ti):
        # Clamp so a phantom block (only possible when the 2-way split does
        # not divide the block count) never issues an out-of-range DMA; its
        # contribution is fully masked out in-kernel anyway.
        return (jnp.minimum(pi * num_tiles + ti, blocks_total - 1), 0)

    parts = pl.pallas_call(
        kernel,
        out_shape=jax.ShapeDtypeStruct((num_splits, 1), jnp.float32),
        grid_spec=pltpu.PrefetchScalarGridSpec(
            num_scalar_prefetch=0,
            grid=(num_splits, num_tiles),
            in_specs=[pl.BlockSpec((row_tile, cols), row_block)],
            out_specs=pl.BlockSpec((1, 1), lambda pi, ti: (pi, 0)),
            scratch_shapes=[pltpu.VMEM((_ACC_SUBLANES, cols), jnp.float32)],
        ),
        compiler_params=pltpu.CompilerParams(dimension_semantics=dims),
        cost_estimate=pl.CostEstimate(
            flops=3 * n,
            transcendentals=0,
            bytes_accessed=int(n * view.dtype.itemsize) + 4 * num_splits),
    )(view)

    # Each split is already normalized by 1/n -> tiny (<=2 element) epilogue.
    return jnp.sum(parts)


# ---------------------------------------------------------------------------
# Public API (mirrors Discriminator_loss.forward semantics)
# ---------------------------------------------------------------------------
def discriminator_loss(real_pred, fake_pred, *, force_streaming=False,
                       max_row_tile=_MAX_ROW_TILE):
    """Ladv = MSE(real_pred, 1) + MSE(fake_pred, 0); reductions in Pallas."""
    n_real = int(real_pred.size)
    n_fake = int(fake_pred.size)

    if n_real == 0 or n_fake == 0:
        # torch MSELoss over an empty tensor is NaN.
        return jnp.float32(jnp.nan)

    if not force_streaming and (n_real + n_fake) <= _SMALL_THRESHOLD:
        # Typical PatchGAN-sized predictions: single fused kernel.
        return _fused_small_loss(_as_2d(real_pred), _as_2d(fake_pred),
                                 n_real, n_fake)

    num_splits = _num_tensorcores()
    mse_real = _mse_const_streaming(real_pred, 1.0, num_splits, max_row_tile)
    mse_fake = _mse_const_streaming(fake_pred, 0.0, num_splits, max_row_tile)
    return mse_real + mse_fake


def discriminator_loss_forward(Qh, Ph, Qh_hat, Qh_ew, Ph_ew, Jr, Qr_ew, Pr_ew,
                               Phi_h, Phi_r, Real_pred, Fake_pred):
    """Mirrors Discriminator_loss.forward; only Real_pred/Fake_pred are used."""
    return discriminator_loss(Real_pred, Fake_pred)


if __name__ == "__main__":
    key = jax.random.PRNGKey(0)
    k1, k2, k3, k4, k5, k6 = jax.random.split(key, 6)

    # 1) Typical small patch-discriminator prediction maps (fused fast path).
    real_pred = jax.random.normal(k1, (2, 1, 16, 16), dtype=jnp.float32)
    fake_pred = jax.random.normal(k2, (2, 1, 16, 16), dtype=jnp.float32)
    loss = jax.block_until_ready(
        jax.jit(discriminator_loss)(real_pred, fake_pred))
    ref = jnp.mean((real_pred - 1.0) ** 2) + jnp.mean(fake_pred ** 2)
    assert jnp.allclose(loss, ref, rtol=1e-5, atol=1e-5), (loss, ref)

    # 2) Streaming path: lane-dense view, multi-tile grid with a ragged
    #    (masked) final block, f32.
    rp = jax.random.normal(k3, (25, 1, 8, 128), dtype=jnp.float32)
    fp = jax.random.normal(k4, (25, 1, 8, 128), dtype=jnp.float32)
    stream_f32 = jax.jit(functools.partial(
        discriminator_loss, force_streaming=True, max_row_tile=64))
    loss_s = jax.block_until_ready(stream_f32(rp, fp))
    ref_s = jnp.mean((rp - 1.0) ** 2) + jnp.mean(fp ** 2)
    assert jnp.allclose(loss_s, ref_s, rtol=1e-5, atol=1e-5), (loss_s, ref_s)

    # 3) Streaming path: non-128 lane count (PatchGAN 30x30) + bf16 packing.
    rp16 = jax.random.normal(k5, (3, 1, 30, 30), dtype=jnp.bfloat16)
    fp16 = jax.random.normal(k6, (3, 1, 30, 30), dtype=jnp.bfloat16)
    stream_bf16 = jax.jit(functools.partial(
        discriminator_loss, force_streaming=True, max_row_tile=32))
    loss_b = jax.block_until_ready(stream_bf16(rp16, fp16))
    ref_b = (jnp.mean((rp16.astype(jnp.float32) - 1.0) ** 2)
             + jnp.mean(fp16.astype(jnp.float32) ** 2))
    assert jnp.allclose(loss_b, ref_b, rtol=1e-3, atol=1e-3), (loss_b, ref_b)

    print("KERNEL_OK")
</pallas_src>

<mosaic_0001>
module attributes {stable_mosaic.version = 11 : i64} {
  func.func @kernel(%arg0: memref<4x128xf32, #tpu.memory_space<vmem>>, %arg1: memref<4x128xf32, #tpu.memory_space<vmem>>, %arg2: memref<1x1xf32, #tpu.memory_space<vmem>>) attributes {dimension_semantics = [], scalar_prefetch = 0 : i64, scratch_operands = 0 : i64, tpu.core_type = #tpu.core_type<tc>} {
    %c0 = arith.constant 0 : index
    %c0_0 = arith.constant 0 : index
    %0 = vector.load %arg0[%c0, %c0_0] : memref<4x128xf32, #tpu.memory_space<vmem>>, vector<4x128xf32>
    %c0_1 = arith.constant 0 : index
    %c0_2 = arith.constant 0 : index
    %1 = vector.load %arg1[%c0_1, %c0_2] : memref<4x128xf32, #tpu.memory_space<vmem>>, vector<4x128xf32>
    %cst = arith.constant 1.000000e+00 : f32
    %2 = vector.broadcast %cst : f32 to vector<4x128xf32>
    %3 = arith.subf %0, %2 : vector<4x128xf32>
    %4 = arith.mulf %3, %3 : vector<4x128xf32>
    %5 = vector.shape_cast %4 : vector<4x128xf32> to vector<1x4x128xf32>
    %cst_3 = arith.constant dense<0.000000e+00> : vector<1xf32>
    %6 = vector.multi_reduction <add>, %5, %cst_3 [1, 2] : vector<1x4x128xf32> to vector<1xf32>
    %7 = vector.shape_cast %6 : vector<1xf32> to vector<1x1x1xf32>
    %8 = vector.extract %7[0, 0, 0] : f32 from vector<1x1x1xf32>
    %9 = vector.broadcast %8 : f32 to vector<1x1xf32>
    %10 = arith.mulf %1, %1 : vector<4x128xf32>
    %11 = vector.shape_cast %10 : vector<4x128xf32> to vector<1x4x128xf32>
    %cst_4 = arith.constant dense<0.000000e+00> : vector<1xf32>
    %12 = vector.multi_reduction <add>, %11, %cst_4 [1, 2] : vector<1x4x128xf32> to vector<1xf32>
    %13 = vector.shape_cast %12 : vector<1xf32> to vector<1x1x1xf32>
    %14 = vector.extract %13[0, 0, 0] : f32 from vector<1x1x1xf32>
    %15 = vector.broadcast %14 : f32 to vector<1x1xf32>
    %cst_5 = arith.constant 0.001953125 : f32
    %16 = vector.broadcast %cst_5 : f32 to vector<1x1xf32>
    %17 = arith.mulf %9, %16 : vector<1x1xf32>
    %cst_6 = arith.constant 0.001953125 : f32
    %18 = vector.broadcast %cst_6 : f32 to vector<1x1xf32>
    %19 = arith.mulf %15, %18 : vector<1x1xf32>
    %20 = arith.addf %17, %19 : vector<1x1xf32>
    %c0_7 = arith.constant 0 : index
    %c0_8 = arith.constant 0 : index
    %21 = vector.load %arg2[%c0_7, %c0_8] : memref<1x1xf32, #tpu.memory_space<vmem>>, vector<1x1xf32>
    tpu.vector_store %arg2[%c0_7, %c0_8], %20 {strides = array<i32>} : memref<1x1xf32, #tpu.memory_space<vmem>>, vector<1x1xf32>,
    return
  }
}

</mosaic_0001>

<llo_original>
// kernel: discriminator_loss.1
$region0: #{discriminator_loss.1}
  #allocation0 [shape = 'u32[]', space=smem, size = 0x4, offset = 0x4, fixed_abs, tag = 'smem constant byte address 0x4 - core index']
  #allocation1 [shape = 'u32[144,128]{1,0:T(1,128)}', space=vmem, size = 0x12000, scoped, tag = 'internal scratch']
  %s0 = inlined_call_operand.vmem [shape: f32[4,128], index: 0, kind: input, shape index: {}]
  %s1 = inlined_call_operand.vmem [shape: f32[4,128], index: 1, kind: input, shape index: {}]
  %s2 = inlined_call_operand.hbm [shape: f32[1,1], index: 2, kind: output, shape index: {}]
  %s3 = sld [smem:[#allocation0]]
  $region18: #{discriminator_loss.1} parent=0
    _
  %s5 = ssub.s32 1, %s3
  %s6 = scalar_select 0, %s5, %s3
  $region1: #{discriminator_loss.1} parent=0
    #allocation2 [shape = 'u8[512]{0}', space=vmem, size = 0x400, scoped, tag = 'output window, operand 0, single buffered']
    #allocation3 [shape = 's32[1]{0}', space=sflag, size = 0x4, scoped, tag = 'scoped memory for discriminator_loss.1']
    %7 = vsyncpa [#allocation3], 0
    // Predicated region
    $region2: #{discriminator_loss.1} parent=1 // pred_check
      _
    $region3: #{discriminator_loss.1} parent=1 // pred_check_branch
      %9 = sbr.rel (0) target = $region5
    $region4: #{discriminator_loss.1} parent=1 // pred_region
      _
    $region5: #{discriminator_loss.1} parent=1 // pred_fallthru
      _
    // Predicated region
    $region6: #{discriminator_loss.1} parent=1 // pred_check
      _
    $region7: #{discriminator_loss.1} parent=1 // pred_check_branch
      %11 = sbr.rel (0) target = $region9
    $region8: #{discriminator_loss.1} parent=1 // pred_region
      _
    $region9: #{discriminator_loss.1} parent=1 // pred_fallthru
      _
    %v12 = vld [vmem:[%s0] sm:$0xf]
    %v13 = vld [vmem:[%s1] sm:$0xf]
    %v14 = vsub.f32 %v12, 1.0
    %v15 = vmul.f32 %v14, %v14
    %vm16 = vcmask 1043456
    %v17 = vsel %vm16, %v15, 0.0
    %18 = vadd.xlane.f32.xlu0 %v17
    %v19 = vpop.xlane.xlu0 %18
    %v20 = vrot.slane %v19, 4
    %v21 = vadd.f32 %v19, %v20
    %v22 = vrot.slane %v21, 2
    %v23 = vadd.f32 %v21, %v22
    %v24 = vrot.slane %v23, 1
    %v25 = vadd.f32 %v23, %v24
    %s26 = vtos %v25
    %v27 = vstv %s26
    %v28 = vmul.f32 %v13, %v13
    %v29 = vsel %vm16, %v28, 0.0
    %30 = vadd.xlane.f32.xlu0 %v29
    %v31 = vpop.xlane.xlu0 %30
    %v32 = vrot.slane %v31, 4
    %v33 = vadd.f32 %v31, %v32
    %v34 = vrot.slane %v33, 2
    %v35 = vadd.f32 %v33, %v34
    %v36 = vrot.slane %v35, 1
    %v37 = vadd.f32 %v35, %v36
    %s38 = vtos %v37
    %v39 = vstv %s38
    %v40 = vmul.f32 %v27, 0.001953125
    %v41 = vmul.f32 %v39, 0.001953125
    %v42 = vadd.f32 %v40, %v41
    %vm43 = vcmask 0
    %44 = vst.msk [vmem:[#allocation2] sm:$0x1] %vm43, %v42
    // Predicated region
    $region10: #{discriminator_loss.1} parent=1 // pred_check
      _
    $region11: #{discriminator_loss.1} parent=1 // pred_check_branch
      %46 = sbr.rel (0) target = $region13
    $region12: #{discriminator_loss.1} parent=1 // pred_region
      %s48 = ssub.s32 16, 16
      %49 = vsyncadd [#allocation3], %s48
      %s51 = sshll.u32 [#allocation2], 4
      %s52 = int_to_ptr.vmem [resolvable:$true] %s51
      %54 = dma.vmem_to_hbm [thread:$0]  %s52, 16, %s2, [#allocation3]
    $region13: #{discriminator_loss.1} parent=1 // pred_fallthru
      _
    // Predicated region
    $region14: #{discriminator_loss.1} parent=1 // pred_check
      _
    $region15: #{discriminator_loss.1} parent=1 // pred_check_branch
      %56 = sbr.rel (0) target = $region17
    $region16: #{discriminator_loss.1} parent=1 // pred_region
      %57 = dma.done [#allocation3], 16
    $region17: #{discriminator_loss.1} parent=1 // pred_fallthru
      _
    %58 = vsyncpa [#allocation3], 1

</llo_original>
